<compile_context>
chip_gen: v5e
topology: v5e:2x2
jax: 0.10.0
libtpu: 0.0.40
codegen_flags: <defaults>
</compile_context>

<pallas_src>
import functools
import math
from typing import NamedTuple

import jax
import jax.numpy as jnp
from jax.experimental import pallas as pl
from jax.experimental.pallas import tpu as pltpu


_LANE_ALIGN = 256           # MXU-friendly lane padding (v6e/v7x 2x256x256; multiple of v5e 128)
_VMEM_BUDGET_FRACTION = 0.72  # leave headroom for Mosaic internal scratch / temporaries


def _round_up(x, m):
    return ((x + m - 1) // m) * m


def _query_tpu():
    """Best-effort, generation-aware hardware query (conservative fallbacks)."""
    vmem = 64 * 1024 * 1024   # conservative default = v7x per-TensorCore VMEM
    cores = 1
    try:
        info = pltpu.get_tpu_info()
        v = getattr(info, "vmem_capacity_bytes", None)
        if v:
            vmem = int(v)
        for attr in ("num_cores", "core_count", "tensorcore_count", "num_tensorcores"):
            c = getattr(info, attr, None)
            if c:
                cores = int(c)
                break
    except Exception:
        pass
    if cores == 1:
        try:
            c = getattr(jax.devices()[0], "num_cores", None)
            if c:
                cores = int(c)
        except Exception:
            pass
    return vmem, cores


_TPU_VMEM_BYTES, _TPU_NUM_CORES = _query_tpu()
# Scoped VMEM limit: full physical capacity (not the conservative default),
# clamped to a sane range. Tile auto-sizing keeps usage well under this.
_VMEM_LIMIT_BYTES = max(32 << 20, min(_TPU_VMEM_BYTES, 128 << 20))


class FFNParams(NamedTuple):
    w1: jax.Array      # (E_pad, H_pad)
    b1: jax.Array      # (1, H_pad)   original dtype (bias add stays f32 in-kernel)
    w2: jax.Array      # (H_pad, E_pad)
    b2: jax.Array      # (1, E_pad)
    embd_dim: int
    hidden_dim: int


def prepare_ffn_params(w1, b1, w2, b2, *, mxu_dtype=None):
    """Pad/align the FFN weights ONCE, outside the per-token call path.

    w1: (E, H), b1: (H,)/(1,H), w2: (H, E), b2: (E,)/(1,E)  with H = proj_factor*E.
    mxu_dtype: optionally cast W1/W2 (e.g. to jnp.bfloat16) so the matmuls run at
      the MXU's native bf16 rate; accumulation stays f32, biases keep their dtype.
    """
    E, H = w1.shape
    assert w2.shape == (H, E), "w2 must be (hidden, embd_dim)"
    E_pad = _round_up(E, _LANE_ALIGN)
    H_pad = _round_up(H, _LANE_ALIGN)
    wdt = jnp.dtype(mxu_dtype) if mxu_dtype is not None else w1.dtype
    w1p = jnp.pad(w1.astype(wdt), ((0, E_pad - E), (0, H_pad - H)))
    w2p = jnp.pad(w2.astype(wdt), ((0, H_pad - H), (0, E_pad - E)))
    b1p = jnp.pad(jnp.reshape(b1, (1, H)), ((0, 0), (0, H_pad - H)))
    b2p = jnp.pad(jnp.reshape(b2, (1, E)), ((0, 0), (0, E_pad - E)))
    return FFNParams(w1p, b1p, w2p, b2p, int(E), int(H))


def _vmem_bytes_estimate(tm, th, E_pad, x_isz, w_isz, o_isz, b_isz):
    acc = tm * E_pad * 4                      # resident f32 accumulator
    x_buf = tm * E_pad * x_isz * 1            # single-buffered (index constant along k)
    o_buf = tm * E_pad * o_isz * 2            # double-buffered output (writeback overlap)
    w1_buf = E_pad * th * w_isz * 2           # double-buffered W1 slab
    w2_buf = th * E_pad * w_isz * 2           # double-buffered W2 slab
    b_buf = th * b_isz * 2 + E_pad * b_isz    # biases
    hidden = tm * th * 4 * 2                  # (tm, th) f32 intermediate + headroom
    return acc + x_buf + o_buf + w1_buf + w2_buf + b_buf + hidden


def _tile_plan(M, E_pad, H_pad, x_isz, w_isz, o_isz, b_isz, block_m, block_h):
    """Pick (tm, th, M_pad) that satisfy (8,128) tiling and fit the chip's VMEM."""
    sub = 16 if x_isz <= 2 else 8
    budget = int(_TPU_VMEM_BYTES * _VMEM_BUDGET_FRACTION)

    block_h = max(256, int(block_h))
    th_cands = [t for t in (2048, 1024, 512, 256)
                if t <= block_h and t <= H_pad and H_pad % t == 0]
    if not th_cands:                      # defensive; H_pad is always a 256-multiple
        th_cands = [256] if H_pad % 256 == 0 else [H_pad]

    Mr = _round_up(max(int(M), 1), sub)
    tm_max = min(_round_up(max(int(block_m), sub), sub), Mr)
    # v7x has 2 TensorCores: guarantee >= 2 blocks along the "parallel" M axis
    # when M allows it, so the grid actually shards across both cores.
    if _TPU_NUM_CORES >= 2 and Mr >= 2 * sub:
        tm_max = min(tm_max, _round_up((M + 1) // 2, sub))

    tm_cands = []
    t = tm_max
    while True:
        tm_cands.append(t)
        if t <= sub:
            break
        nt = max(sub, _round_up(t // 2, sub))
        if nt == t:
            break
        t = nt

    # Prefer large tm (arithmetic intensity ~ 2*tm/itemsize flops/byte of weight
    # streaming), then the largest th that still fits the VMEM budget.
    for tm in tm_cands:
        for th in th_cands:
            if _vmem_bytes_estimate(tm, th, E_pad, x_isz, w_isz, o_isz, b_isz) <= budget:
                return tm, th, _round_up(M, tm)
    # TODO(synk): for very large embd_dim (E_pad so big that even tm=8 overflows the
    # budget), add a third grid axis tiling E for the output/accumulator.
    tm, th = tm_cands[-1], th_cands[-1]
    return tm, th, _round_up(M, tm)


def _ffn_kernel(x_ref, w1_ref, b1_ref, w2_ref, b2_ref, o_ref, acc_ref):
    # x_ref : (tm, E_pad)   activation tile (resident across the H axis)
    # w1_ref: (E_pad, th)   W1 column slab     b1_ref: (1, th)
    # w2_ref: (th, E_pad)   W2 row slab        b2_ref: (1, E_pad)
    # acc_ref: (tm, E_pad)  f32 VMEM accumulator, resident across the H axis
    k = pl.program_id(1)

    @pl.when(k == 0)
    def _init():
        acc_ref[...] = jnp.zeros_like(acc_ref)

    # First linear (hidden slab) + ReLU. Operands are cast to the weight dtype so an
    # f32 model can run the matmuls at the MXU's native bf16 rate when the weights
    # were prepared with mxu_dtype=bf16; accumulation stays f32 on the MXU.
    x = x_ref[...].astype(w1_ref.dtype)
    h = jnp.dot(x, w1_ref[...], preferred_element_type=jnp.float32)
    h = jnp.maximum(h + b1_ref[...].astype(jnp.float32), 0.0)

    # Second linear (slab), accumulated into the resident f32 tile.
    acc_ref[...] += jnp.dot(h.astype(w2_ref.dtype), w2_ref[...],
                            preferred_element_type=jnp.float32)

    @pl.when(k == pl.num_programs(1) - 1)
    def _finalize():
        # TODO(synk): training-mode dropout (stochastic masking via pltpu.prng_*) not
        # implemented; nn.Dropout is the identity in eval/inference mode.
        o_ref[...] = (acc_ref[...] + b2_ref[...].astype(jnp.float32)).astype(o_ref.dtype)


@functools.partial(jax.jit, static_argnames=("E", "H", "block_m", "block_h"))
def _feed_forward_impl(x, w1p, b1p, w2p, b2p, *, E, H, block_m, block_h):
    orig_shape = x.shape
    assert orig_shape[-1] == E, "last dim of x must equal embd_dim"
    M = int(math.prod(orig_shape[:-1]))
    E_pad, H_pad = w1p.shape
    dtype = x.dtype
    x_isz = jnp.dtype(dtype).itemsize
    w_isz = jnp.dtype(w1p.dtype).itemsize
    b_isz = jnp.dtype(b1p.dtype).itemsize

    tm, th, M_pad = _tile_plan(M, E_pad, H_pad, x_isz, w_isz, x_isz, b_isz,
                               block_m, block_h)

    x2 = x.reshape(M, E)
    if (M_pad, E_pad) != (M, E):
        x2 = jnp.pad(x2, ((0, M_pad - M), (0, E_pad - E)))

    grid = (M_pad // tm, H_pad // th)
    num_m_blocks = grid[0]

    # Bytes: x read + out write once, weights/b1 re-streamed once per M block.
    bytes_accessed = int(
        M_pad * E_pad * x_isz * 2
        + num_m_blocks * (2 * E_pad * H_pad * w_isz + H_pad * b_isz)
        + E_pad * b_isz)
    cost = pl.CostEstimate(flops=4 * M_pad * E_pad * H_pad,
                           transcendentals=0,
                           bytes_accessed=bytes_accessed)

    out2 = pl.pallas_call(
        _ffn_kernel,
        out_shape=jax.ShapeDtypeStruct((M_pad, E_pad), dtype),
        grid_spec=pltpu.PrefetchScalarGridSpec(
            num_scalar_prefetch=0,
            grid=grid,
            in_specs=[
                # x tile and b2 have a constant block index along the k (hidden) axis:
                # a second pipeline buffer is pure VMEM waste -> single-buffer them.
                pl.BlockSpec((tm, E_pad), lambda i, k: (i, 0),
                             pipeline_mode=pl.Buffered(buffer_count=1)),
                pl.BlockSpec((E_pad, th), lambda i, k: (0, k)),   # W1 slab (double-buffered)
                pl.BlockSpec((1, th),     lambda i, k: (0, k)),   # b1 slab
                pl.BlockSpec((th, E_pad), lambda i, k: (k, 0)),   # W2 slab (double-buffered)
                pl.BlockSpec((1, E_pad),  lambda i, k: (0, 0),
                             pipeline_mode=pl.Buffered(buffer_count=1)),  # b2
            ],
            # Output stays double-buffered so its writeback overlaps the next M block.
            out_specs=pl.BlockSpec((tm, E_pad), lambda i, k: (i, 0)),
            scratch_shapes=[pltpu.VMEM((tm, E_pad), jnp.float32)],
        ),
        compiler_params=pltpu.CompilerParams(
            dimension_semantics=("parallel", "arbitrary"),
            vmem_limit_bytes=_VMEM_LIMIT_BYTES,
        ),
        cost_estimate=cost,
    )(x2, w1p, b1p, w2p, b2p)

    if (M_pad, E_pad) != (M, E):
        out2 = out2[:M, :E]
    return out2.reshape(orig_shape)


def feed_forward(x, params, *, block_m=1024, block_h=1024):
    """x: (..., E) -> (..., E). `params` from prepare_ffn_params (pre-padded weights).

    Dropout is the identity (eval/inference mode). block_m/block_h are soft upper
    bounds; actual tiles are rounded to (8,128)-legal sizes and auto-shrunk to fit
    the chip's VMEM.
    """
    w1p, b1p, w2p, b2p, E, H = params
    return _feed_forward_impl(x, w1p, b1p, w2p, b2p, E=int(E), H=int(H),
                              block_m=int(block_m), block_h=int(block_h))


def init_params(key, embd_dim, proj_factor, dtype=jnp.float32):
    """Deterministic parameter init (PyTorch-Linear-style uniform bounds)."""
    hidden = proj_factor * embd_dim
    k1, k2, k3, k4 = jax.random.split(key, 4)
    bound1 = 1.0 / (embd_dim ** 0.5)
    bound2 = 1.0 / (hidden ** 0.5)
    w1 = jax.random.uniform(k1, (embd_dim, hidden), dtype, -bound1, bound1)
    b1 = jax.random.uniform(k2, (1, hidden), dtype, -bound1, bound1)
    w2 = jax.random.uniform(k3, (hidden, embd_dim), dtype, -bound2, bound2)
    b2 = jax.random.uniform(k4, (1, embd_dim), dtype, -bound2, bound2)
    return w1, b1, w2, b2


if __name__ == "__main__":
    # Small shapes implied by the module: (batch, seq, embd_dim)
    B, T, E = 2, 8, 32
    PROJ_FACTOR = 4
    DROPOUT = 0.1  # inactive at inference

    key = jax.random.PRNGKey(0)
    kx, kp = jax.random.split(key)
    x = jax.random.normal(kx, (B, T, E), jnp.float32)
    w1, b1, w2, b2 = init_params(kp, E, PROJ_FACTOR)

    ref = (jnp.maximum(x.reshape(-1, E) @ w1 + b1, 0.0) @ w2 + b2).reshape(B, T, E)

    # ---- f32 path: near-exact against the plain-JAX reference ----
    params_f32 = prepare_ffn_params(w1, b1, w2, b2)
    out = jax.block_until_ready(feed_forward(x, params_f32))
    assert out.shape == (B, T, E) and out.dtype == x.dtype
    assert jnp.allclose(out, ref, atol=1e-5, rtol=1e-5)

    # ---- f32 activations, bf16 MXU operands (f32 accumulation): MXU-rate option ----
    params_bf_mxu = prepare_ffn_params(w1, b1, w2, b2, mxu_dtype=jnp.bfloat16)
    out_mxu = jax.block_until_ready(feed_forward(x, params_bf_mxu))
    assert out_mxu.dtype == jnp.float32
    assert jnp.allclose(out_mxu, ref, atol=3e-2, rtol=3e-2)

    # ---- end-to-end bf16 path ----
    bf = jnp.bfloat16
    xb = x.astype(bf)
    params_bf = prepare_ffn_params(w1.astype(bf), b1.astype(bf),
                                   w2.astype(bf), b2.astype(bf))
    out_bf = jax.block_until_ready(feed_forward(xb, params_bf))
    assert out_bf.dtype == bf
    xf, w1f, b1f, w2f, b2f = (a.astype(jnp.float32) for a in
                              (xb, w1.astype(bf), b1.astype(bf), w2.astype(bf), b2.astype(bf)))
    ref_bf = (jnp.maximum(xf.reshape(-1, E) @ w1f + b1f, 0.0) @ w2f + b2f).reshape(B, T, E)
    assert jnp.allclose(out_bf.astype(jnp.float32), ref_bf, atol=3e-2, rtol=3e-2)

    print("KERNEL_OK")
</pallas_src>

<mosaic_0001>
module attributes {stable_mosaic.version = 11 : i64} {
  func.func @_ffn_kernel(%arg0: i32, %arg1: i32, %arg2: memref<16x256xf32, #tpu.memory_space<vmem>>, %arg3: memref<256x256xf32, #tpu.memory_space<vmem>>, %arg4: memref<1x256xf32, #tpu.memory_space<vmem>>, %arg5: memref<256x256xf32, #tpu.memory_space<vmem>>, %arg6: memref<1x256xf32, #tpu.memory_space<vmem>>, %arg7: memref<16x256xf32, #tpu.memory_space<vmem>>, %arg8: memref<16x256xf32, #tpu.memory_space<vmem>>) attributes {dimension_semantics = [#tpu.dimension_semantics<parallel>, #tpu.dimension_semantics<arbitrary>], iteration_bounds = array<i64: 1, 1>, scalar_prefetch = 0 : i64, scratch_operands = 1 : i64, tpu.core_type = #tpu.core_type<tc>, window_params = [{pipeline_mode = #tpu.pipeline_mode<synchronous>, transform_indices = @transform_0, window_bounds = array<i64: 16, 256>}, {transform_indices = @transform_1, window_bounds = array<i64: 256, 256>}, {transform_indices = @transform_2, window_bounds = array<i64: 1, 256>}, {transform_indices = @transform_3, window_bounds = array<i64: 256, 256>}, {pipeline_mode = #tpu.pipeline_mode<synchronous>, transform_indices = @transform_4, window_bounds = array<i64: 1, 256>}, {transform_indices = @transform_5, window_bounds = array<i64: 16, 256>}]} {
    %c0_i32 = arith.constant 0 : i32
    %0 = arith.cmpi eq, %arg1, %c0_i32 : i32
    %1 = arith.extui %0 : i1 to i32
    %c0_i32_0 = arith.constant 0 : i32
    %2 = arith.cmpi ne, %1, %c0_i32_0 : i32
    scf.if %2 {
      %cst_16 = arith.constant 0.000000e+00 : f32
      %19 = vector.broadcast %cst_16 : f32 to vector<16x256xf32>
      %c0_17 = arith.constant 0 : index
      %c0_18 = arith.constant 0 : index
      %20 = vector.load %arg8[%c0_17, %c0_18] : memref<16x256xf32, #tpu.memory_space<vmem>>, vector<16x256xf32>
      tpu.vector_store %arg8[%c0_17, %c0_18], %19 {strides = array<i32>} : memref<16x256xf32, #tpu.memory_space<vmem>>, vector<16x256xf32>,
    } else {
    }
    %c0 = arith.constant 0 : index
    %c0_1 = arith.constant 0 : index
    %3 = vector.load %arg2[%c0, %c0_1] : memref<16x256xf32, #tpu.memory_space<vmem>>, vector<16x256xf32>
    %c0_2 = arith.constant 0 : index
    %c0_3 = arith.constant 0 : index
    %4 = vector.load %arg3[%c0_2, %c0_3] : memref<256x256xf32, #tpu.memory_space<vmem>>, vector<256x256xf32>
    %cst = arith.constant dense<0.000000e+00> : vector<16x256xf32>
    %5 = tpu.matmul %3, %4, %cst {dimension_numbers = #tpu.dot_dimension_numbers<[1], [0], [0], [1], [0, 0, 1, 1], [], []>} : vector<16x256xf32>, vector<256x256xf32>, vector<16x256xf32> -> vector<16x256xf32>
    %c0_4 = arith.constant 0 : index
    %c0_5 = arith.constant 0 : index
    %6 = vector.load %arg4[%c0_4, %c0_5] : memref<1x256xf32, #tpu.memory_space<vmem>>, vector<1x256xf32>
    %7 = vector.broadcast %6 : vector<1x256xf32> to vector<16x256xf32>
    %8 = arith.addf %5, %7 : vector<16x256xf32>
    %cst_6 = arith.constant 0.000000e+00 : f32
    %9 = vector.broadcast %cst_6 : f32 to vector<16x256xf32>
    %10 = arith.maximumf %8, %9 : vector<16x256xf32>
    %c0_7 = arith.constant 0 : index
    %c0_8 = arith.constant 0 : index
    %11 = vector.load %arg8[%c0_7, %c0_8] : memref<16x256xf32, #tpu.memory_space<vmem>>, vector<16x256xf32>
    %c0_9 = arith.constant 0 : index
    %c0_10 = arith.constant 0 : index
    %12 = vector.load %arg5[%c0_9, %c0_10] : memref<256x256xf32, #tpu.memory_space<vmem>>, vector<256x256xf32>
    %cst_11 = arith.constant dense<0.000000e+00> : vector<16x256xf32>
    %13 = tpu.matmul %10, %12, %cst_11 {dimension_numbers = #tpu.dot_dimension_numbers<[1], [0], [0], [1], [0, 0, 1, 1], [], []>} : vector<16x256xf32>, vector<256x256xf32>, vector<16x256xf32> -> vector<16x256xf32>
    %14 = arith.addf %11, %13 : vector<16x256xf32>
    %c0_12 = arith.constant 0 : index
    %c0_13 = arith.constant 0 : index
    %15 = vector.load %arg8[%c0_12, %c0_13] : memref<16x256xf32, #tpu.memory_space<vmem>>, vector<16x256xf32>
    tpu.vector_store %arg8[%c0_12, %c0_13], %14 {strides = array<i32>} : memref<16x256xf32, #tpu.memory_space<vmem>>, vector<16x256xf32>,
    %c0_i32_14 = arith.constant 0 : i32
    %16 = arith.cmpi eq, %arg1, %c0_i32_14 : i32
    %17 = arith.extui %16 : i1 to i32
    %c0_i32_15 = arith.constant 0 : i32
    %18 = arith.cmpi ne, %17, %c0_i32_15 : i32
    scf.if %18 {
      %c0_16 = arith.constant 0 : index
      %c0_17 = arith.constant 0 : index
      %19 = vector.load %arg8[%c0_16, %c0_17] : memref<16x256xf32, #tpu.memory_space<vmem>>, vector<16x256xf32>
      %c0_18 = arith.constant 0 : index
      %c0_19 = arith.constant 0 : index
      %20 = vector.load %arg6[%c0_18, %c0_19] : memref<1x256xf32, #tpu.memory_space<vmem>>, vector<1x256xf32>
      %21 = vector.broadcast %20 : vector<1x256xf32> to vector<16x256xf32>
      %22 = arith.addf %19, %21 : vector<16x256xf32>
      %c0_20 = arith.constant 0 : index
      %c0_21 = arith.constant 0 : index
      %23 = vector.load %arg7[%c0_20, %c0_21] : memref<16x256xf32, #tpu.memory_space<vmem>>, vector<16x256xf32>
      tpu.vector_store %arg7[%c0_20, %c0_21], %22 {strides = array<i32>} : memref<16x256xf32, #tpu.memory_space<vmem>>, vector<16x256xf32>,
    } else {
    }
    return
  }
  func.func @transform_0(%arg0: i32, %arg1: i32) -> (i32, i32) {
    %c0_i32 = arith.constant 0 : i32
    %c0_i32_0 = arith.constant 0 : i32
    return %arg0, %c0_i32 : i32, i32
  }
  func.func @transform_1(%arg0: i32, %arg1: i32) -> (i32, i32) {
    %c0_i32 = arith.constant 0 : i32
    %c0_i32_0 = arith.constant 0 : i32
    return %c0_i32, %arg1 : i32, i32
  }
  func.func @transform_2(%arg0: i32, %arg1: i32) -> (i32, i32) {
    %c0_i32 = arith.constant 0 : i32
    %c0_i32_0 = arith.constant 0 : i32
    return %c0_i32, %arg1 : i32, i32
  }
  func.func @transform_3(%arg0: i32, %arg1: i32) -> (i32, i32) {
    %c0_i32 = arith.constant 0 : i32
    %c0_i32_0 = arith.constant 0 : i32
    return %arg1, %c0_i32 : i32, i32
  }
  func.func @transform_4(%arg0: i32, %arg1: i32) -> (i32, i32) {
    %c0_i32 = arith.constant 0 : i32
    %c0_i32_0 = arith.constant 0 : i32
    %c0_i32_1 = arith.constant 0 : i32
    return %c0_i32, %c0_i32_0 : i32, i32
  }
  func.func @transform_5(%arg0: i32, %arg1: i32) -> (i32, i32) {
    %c0_i32 = arith.constant 0 : i32
    %c0_i32_0 = arith.constant 0 : i32
    return %arg0, %c0_i32 : i32, i32
  }
}

</mosaic_0001>

<llo_original>
// kernel: _feed_forward_impl.1
$region0: #{_feed_forward_impl.1}
  #allocation0 [shape = 'u32[]', space=smem, size = 0x4, offset = 0x4, fixed_abs, tag = 'smem constant byte address 0x4 - core index']
  #allocation1 [shape = 'u32[72,128]{1,0:T(1,128)}', space=vmem, size = 0x9000, scoped, tag = 'internal scratch']
  #allocation2 [shape = 'f32[16,256]{1,0:T(8,128)}', space=vmem, size = 0x4000, scoped, tag = 'scratch operand']
  %s0 = inlined_call_operand.vmem [shape: f32[16,256], index: 0, kind: input, shape index: {}]
  %s1 = inlined_call_operand.hbm [shape: f32[256,256], index: 1, kind: input, shape index: {}]
  %s2 = inlined_call_operand.vmem [shape: f32[1,256], index: 2, kind: input, shape index: {}]
  %s3 = inlined_call_operand.hbm [shape: f32[256,256], index: 3, kind: input, shape index: {}]
  %s4 = inlined_call_operand.vmem [shape: f32[1,256], index: 4, kind: input, shape index: {}]
  %s5 = inlined_call_operand.vmem [shape: f32[16,256], index: 5, kind: output, shape index: {}]
  %s6 = sld [smem:[#allocation0]]
  $region46: #{_feed_forward_impl.1} parent=0
    _
  %s8 = ssub.s32 1, %s6
  %s9 = scalar_select 0, %s8, %s6
  $region1: #{_feed_forward_impl.1} parent=0
    #allocation3 [shape = 'u8[262144]{0}', space=vmem, size = 0x40000, scoped, tag = 'input window, operand 1, single buffered']
    #allocation4 [shape = 's32[1]{0}', space=sflag, size = 0x4, scoped, tag = 'scoped memory for _feed_forward_impl.1']
    #allocation5 [shape = 'u8[262144]{0}', space=vmem, size = 0x40000, scoped, tag = 'input window, operand 3, single buffered']
    #allocation6 [shape = 's32[1]{0}', space=sflag, size = 0x4, scoped, tag = 'scoped memory for _feed_forward_impl.1']
    %10 = vsyncpa [#allocation4], 0
    %11 = vsyncpa [#allocation6], 0
    // Predicated region
    $region2: #{_feed_forward_impl.1} parent=1 // pred_check
      _
    $region3: #{_feed_forward_impl.1} parent=1 // pred_check_branch
      %13 = sbr.rel (0) target = $region5
    $region4: #{_feed_forward_impl.1} parent=1 // pred_region
      _
    $region5: #{_feed_forward_impl.1} parent=1 // pred_fallthru
      _
    // Predicated region
    $region6: #{_feed_forward_impl.1} parent=1 // pred_check
      _
    $region7: #{_feed_forward_impl.1} parent=1 // pred_check_branch
      %15 = sbr.rel (0) target = $region9
    $region8: #{_feed_forward_impl.1} parent=1 // pred_region
      %17 = vsyncadd [#allocation4], 0
      %s18 = sshll.u32 %s1, 4
      %s19 = int_to_ptr.hbm [resolvable:$true] %s18
      %s20 = sshll.u32 [#allocation3], 4
      %s21 = int_to_ptr.vmem [resolvable:$true] %s20
      %26 = dma.hbm_to_vmem [thread:$0]  %s19, 8192, %s21, [#allocation4], 256, 256, 16
    $region9: #{_feed_forward_impl.1} parent=1 // pred_fallthru
      _
    // Predicated region
    $region10: #{_feed_forward_impl.1} parent=1 // pred_check
      _
    $region11: #{_feed_forward_impl.1} parent=1 // pred_check_branch
      %28 = sbr.rel (0) target = $region13
    $region12: #{_feed_forward_impl.1} parent=1 // pred_region
      _
    $region13: #{_feed_forward_impl.1} parent=1 // pred_fallthru
      _
    // Predicated region
    $region14: #{_feed_forward_impl.1} parent=1 // pred_check
      _
    $region15: #{_feed_forward_impl.1} parent=1 // pred_check_branch
      %30 = sbr.rel (0) target = $region17
    $region16: #{_feed_forward_impl.1} parent=1 // pred_region
      %32 = vsyncadd [#allocation6], 0
      %s33 = sshll.u32 %s3, 4
      %s34 = int_to_ptr.hbm [resolvable:$true] %s33
      %s35 = sshll.u32 [#allocation5], 4
      %s36 = int_to_ptr.vmem [resolvable:$true] %s35
      %41 = dma.hbm_to_vmem [thread:$0]  %s34, 8192, %s36, [#allocation6], 256, 256, 16
    $region17: #{_feed_forward_impl.1} parent=1 // pred_fallthru
      _
    // Predicated region
    $region18: #{_feed_forward_impl.1} parent=1 // pred_check
      _
    $region19: #{_feed_forward_impl.1} parent=1 // pred_check_branch
      %43 = sbr.rel (0) target = $region21
    $region20: #{_feed_forward_impl.1} parent=1 // pred_region
      _
    $region21: #{_feed_forward_impl.1} parent=1 // pred_fallthru
      _
    // Predicated region
    $region22: #{_feed_forward_impl.1} parent=1 // pred_check
      _
    $region23: #{_feed_forward_impl.1} parent=1 // pred_check_branch
      %45 = sbr.rel (0) target = $region25
    $region24: #{_feed_forward_impl.1} parent=1 // pred_region
      %47 = dma.done [#allocation4], 8192
    $region25: #{_feed_forward_impl.1} parent=1 // pred_fallthru
      _
    // Predicated region
    $region26: #{_feed_forward_impl.1} parent=1 // pred_check
      _
    $region27: #{_feed_forward_impl.1} parent=1 // pred_check_branch
      %49 = sbr.rel (0) target = $region29
    $region28: #{_feed_forward_impl.1} parent=1 // pred_region
      %51 = dma.done [#allocation6], 8192
    $region29: #{_feed_forward_impl.1} parent=1 // pred_fallthru
      _
    %p52 = scmp.eq.s32.totalorder 0, 0
    // Predicated region
    $region30: #{_feed_forward_impl.1} parent=1 // pred_check
      %p53 = pneg %p52
    $region31: #{_feed_forward_impl.1} parent=1 // pred_check_branch
      %55 = sbr.rel (%p53) target = $region33
    $region32: #{_feed_forward_impl.1} parent=1 // pred_region
      %56 = vst [vmem:[#allocation2] sm:$0xff] 0.0
      %57 = vst [vmem:[#allocation2 + $0x8] sm:$0xff] 0.0
      %58 = vst [vmem:[#allocation2 + $0x10] sm:$0xff] 0.0
      %59 = vst [vmem:[#allocation2 + $0x18] sm:$0xff] 0.0
    $region33: #{_feed_forward_impl.1} parent=1 // pred_fallthru
      _
    %v60 = vld [vmem:[%s0] sm:$0xff]
    %v61 = vld [vmem:[%s0 + $0x8] sm:$0xff]
    %v62 = vld [vmem:[%s0 + $0x10] sm:$0xff]
    %v63 = vld [vmem:[%s0 + $0x18] sm:$0xff]
    %v64 = vld [vmem:[#allocation3] sm:$0xff]
    %v65 = vld [vmem:[#allocation3 + $0x8] sm:$0xff]
    %v66 = vld [vmem:[#allocation3 + $0x10] sm:$0xff]
    %v67 = vld [vmem:[#allocation3 + $0x18] sm:$0xff]
    %v68 = vld [vmem:[#allocation3 + $0x20] sm:$0xff]
    %v69 = vld [vmem:[#allocation3 + $0x28] sm:$0xff]
    %v70 = vld [vmem:[#allocation3 + $0x30] sm:$0xff]
    %v71 = vld [vmem:[#allocation3 + $0x38] sm:$0xff]
    %v72 = vld [vmem:[#allocation3 + $0x40] sm:$0xff]
    %v73 = vld [vmem:[#allocation3 + $0x48] sm:$0xff]
    %v74 = vld [vmem:[#allocation3 + $0x50] sm:$0xff]
    %v75 = vld [vmem:[#allocation3 + $0x58] sm:$0xff]
    %v76 = vld [vmem:[#allocation3 + $0x60] sm:$0xff]
    %v77 = vld [vmem:[#allocation3 + $0x68] sm:$0xff]
    %v78 = vld [vmem:[#allocation3 + $0x70] sm:$0xff]
    %v79 = vld [vmem:[#allocation3 + $0x78] sm:$0xff]
    %v80 = vld [vmem:[#allocation3 + $0x80] sm:$0xff]
    %v81 = vld [vmem:[#allocation3 + $0x88] sm:$0xff]
    %v82 = vld [vmem:[#allocation3 + $0x90] sm:$0xff]
    %v83 = vld [vmem:[#allocation3 + $0x98] sm:$0xff]
    %v84 = vld [vmem:[#allocation3 + $0xa0] sm:$0xff]
    %v85 = vld [vmem:[#allocation3 + $0xa8] sm:$0xff]
    %v86 = vld [vmem:[#allocation3 + $0xb0] sm:$0xff]
    %v87 = vld [vmem:[#allocation3 + $0xb8] sm:$0xff]
    %v88 = vld [vmem:[#allocation3 + $0xc0] sm:$0xff]
    %v89 = vld [vmem:[#allocation3 + $0xc8] sm:$0xff]
    %v90 = vld [vmem:[#allocation3 + $0xd0] sm:$0xff]
    %v91 = vld [vmem:[#allocation3 + $0xd8] sm:$0xff]
    %v92 = vld [vmem:[#allocation3 + $0xe0] sm:$0xff]
    %v93 = vld [vmem:[#allocation3 + $0xe8] sm:$0xff]
    %v94 = vld [vmem:[#allocation3 + $0xf0] sm:$0xff]
    %v95 = vld [vmem:[#allocation3 + $0xf8] sm:$0xff]
    %v96 = vld [vmem:[#allocation3 + $0x100] sm:$0xff]
    %v97 = vld [vmem:[#allocation3 + $0x108] sm:$0xff]
    %v98 = vld [vmem:[#allocation3 + $0x110] sm:$0xff]
    %v99 = vld [vmem:[#allocation3 + $0x118] sm:$0xff]
    %v100 = vld [vmem:[#allocation3 + $0x120] sm:$0xff]
    %v101 = vld [vmem:[#allocation3 + $0x128] sm:$0xff]
    %v102 = vld [vmem:[#allocation3 + $0x130] sm:$0xff]
    %v103 = vld [vmem:[#allocation3 + $0x138] sm:$0xff]
    %v104 = vld [vmem:[#allocation3 + $0x140] sm:$0xff]
    %v105 = vld [vmem:[#allocation3 + $0x148] sm:$0xff]
    %v106 = vld [vmem:[#allocation3 + $0x150] sm:$0xff]
    %v107 = vld [vmem:[#allocation3 + $0x158] sm:$0xff]
    %v108 = vld [vmem:[#allocation3 + $0x160] sm:$0xff]
    %v109 = vld [vmem:[#allocation3 + $0x168] sm:$0xff]
    %v110 = vld [vmem:[#allocation3 + $0x170] sm:$0xff]
    %v111 = vld [vmem:[#allocation3 + $0x178] sm:$0xff]
    %v112 = vld [vmem:[#allocation3 + $0x180] sm:$0xff]
    %v113 = vld [vmem:[#allocation3 + $0x188] sm:$0xff]
    %v114 = vld [vmem:[#allocation3 + $0x190] sm:$0xff]
    %v115 = vld [vmem:[#allocation3 + $0x198] sm:$0xff]
    %v116 = vld [vmem:[#allocation3 + $0x1a0] sm:$0xff]
    %v117 = vld [vmem:[#allocation3 + $0x1a8] sm:$0xff]
    %v118 = vld [vmem:[#allocation3 + $0x1b0] sm:$0xff]
    %v119 = vld [vmem:[#allocation3 + $0x1b8] sm:$0xff]
    %v120 = vld [vmem:[#allocation3 + $0x1c0] sm:$0xff]
    %v121 = vld [vmem:[#allocation3 + $0x1c8] sm:$0xff]
    %v122 = vld [vmem:[#allocation3 + $0x1d0] sm:$0xff]
    %v123 = vld [vmem:[#allocation3 + $0x1d8] sm:$0xff]
    %v124 = vld [vmem:[#allocation3 + $0x1e0] sm:$0xff]
    %v125 = vld [vmem:[#allocation3 + $0x1e8] sm:$0xff]
    %v126 = vld [vmem:[#allocation3 + $0x1f0] sm:$0xff]
    %v127 = vld [vmem:[#allocation3 + $0x1f8] sm:$0xff]
    %v128 = vld [vmem:[%s2] sm:$0x3]
    %v130 = vperm.slane %v128, 0
    %v131 = vperm.slane %v128, 1
    %134 = vmatpush.msra.mxu0 %v94
    %135 = vmatpush.msra.mxu0 %v92
    %136 = vmatpush.msra.mxu0 %v90
    %137 = vmatpush.msra.mxu0 %v88
    %138 = vmatpush.msra.mxu0 %v86
    %139 = vmatpush.msra.mxu0 %v84
    %140 = vmatpush.msra.mxu0 %v82
    %141 = vmatpush.msra.mxu0 %v80
    %142 = vmatpush.msra.mxu0 %v78
    %143 = vmatpush.msra.mxu0 %v76
    %144 = vmatpush.msra.mxu0 %v74
    %145 = vmatpush.msra.mxu0 %v72
    %146 = vmatpush.msra.mxu0 %v70
    %147 = vmatpush.msra.mxu0 %v68
    %148 = vmatpush.msra.mxu0 %v66
    %149 = vmatpush.msra.mxu0 %v64
    %150 = vmatmul.f32.gmra.mxu0 %v60
    %v151 = vpop.f32.mrf.mxu0
    %v152 = vadd.f32 %v130, %v151
    %153 = vmatmul.f32.gmra.mxu0 %v62
    %v154 = vpop.f32.mrf.mxu0
    %v155 = vadd.f32 %v130, %v154
    %156 = vdwg.mxu0
    %157 = vmatpush.msra.mxu0 %v126
    %158 = vmatpush.msra.mxu0 %v124
    %159 = vmatpush.msra.mxu0 %v122
    %160 = vmatpush.msra.mxu0 %v120
    %161 = vmatpush.msra.mxu0 %v118
    %162 = vmatpush.msra.mxu0 %v116
    %163 = vmatpush.msra.mxu0 %v114
    %164 = vmatpush.msra.mxu0 %v112
    %165 = vmatpush.msra.mxu0 %v110
    %166 = vmatpush.msra.mxu0 %v108
    %167 = vmatpush.msra.mxu0 %v106
    %168 = vmatpush.msra.mxu0 %v104
    %169 = vmatpush.msra.mxu0 %v102
    %170 = vmatpush.msra.mxu0 %v100
    %171 = vmatpush.msra.mxu0 %v98
    %172 = vmatpush.msra.mxu0 %v96
    %173 = vmatmul.f32.gmra.mxu0 %v61
    %v174 = vpop.f32.mrf.mxu0
    %v175 = vadd.f32 %v152, %v174
    %176 = vmatmul.f32.gmra.mxu0 %v63
    %v177 = vpop.f32.mrf.mxu0
    %v178 = vadd.f32 %v155, %v177
    %179 = vdwg.mxu0
    %180 = vmatpush.msra.mxu0 %v95
    %181 = vmatpush.msra.mxu0 %v93
    %182 = vmatpush.msra.mxu0 %v91
    %183 = vmatpush.msra.mxu0 %v89
    %184 = vmatpush.msra.mxu0 %v87
    %185 = vmatpush.msra.mxu0 %v85
    %186 = vmatpush.msra.mxu0 %v83
    %187 = vmatpush.msra.mxu0 %v81
    %188 = vmatpush.msra.mxu0 %v79
    %189 = vmatpush.msra.mxu0 %v77
    %190 = vmatpush.msra.mxu0 %v75
    %191 = vmatpush.msra.mxu0 %v73
    %192 = vmatpush.msra.mxu0 %v71
    %193 = vmatpush.msra.mxu0 %v69
    %194 = vmatpush.msra.mxu0 %v67
    %195 = vmatpush.msra.mxu0 %v65
    %196 = vmatmul.f32.gmra.mxu0 %v60
    %v197 = vpop.f32.mrf.mxu0
    %v198 = vadd.f32 %v131, %v197
    %199 = vmatmul.f32.gmra.mxu0 %v62
    %v200 = vpop.f32.mrf.mxu0
    %v201 = vadd.f32 %v131, %v200
    %202 = vdwg.mxu0
    %203 = vmatpush.msra.mxu0 %v127
    %204 = vmatpush.msra.mxu0 %v125
    %205 = vmatpush.msra.mxu0 %v123
    %206 = vmatpush.msra.mxu0 %v121
    %207 = vmatpush.msra.mxu0 %v119
    %208 = vmatpush.msra.mxu0 %v117
    %209 = vmatpush.msra.mxu0 %v115
    %210 = vmatpush.msra.mxu0 %v113
    %211 = vmatpush.msra.mxu0 %v111
    %212 = vmatpush.msra.mxu0 %v109
    %213 = vmatpush.msra.mxu0 %v107
    %214 = vmatpush.msra.mxu0 %v105
    %215 = vmatpush.msra.mxu0 %v103
    %216 = vmatpush.msra.mxu0 %v101
    %217 = vmatpush.msra.mxu0 %v99
    %218 = vmatpush.msra.mxu0 %v97
    %219 = vmatmul.f32.gmra.mxu0 %v61
    %v220 = vpop.f32.mrf.mxu0
    %v221 = vadd.f32 %v198, %v220
    %222 = vmatmul.f32.gmra.mxu0 %v63
    %v223 = vpop.f32.mrf.mxu0
    %v224 = vadd.f32 %v201, %v223
    %225 = vdwg.mxu0
    %v226 = vmax.f32 %v175, 0.0
    %v227 = vmax.f32 %v221, 0.0
    %v228 = vmax.f32 %v178, 0.0
    %v229 = vmax.f32 %v224, 0.0
    %v230 = vld [vmem:[#allocation2] sm:$0xff]
    %v231 = vld [vmem:[#allocation2 + $0x8] sm:$0xff]
    %v232 = vld [vmem:[#allocation2 + $0x10] sm:$0xff]
    %v233 = vld [vmem:[#allocation2 + $0x18] sm:$0xff]
    %v234 = vld [vmem:[#allocation5] sm:$0xff]
    %v235 = vld [vmem:[#allocation5 + $0x8] sm:$0xff]
    %v236 = vld [vmem:[#allocation5 + $0x10] sm:$0xff]
    %v237 = vld [vmem:[#allocation5 + $0x18] sm:$0xff]
    %v238 = vld [vmem:[#allocation5 + $0x20] sm:$0xff]
    %v239 = vld [vmem:[#allocation5 + $0x28] sm:$0xff]
    %v240 = vld [vmem:[#allocation5 + $0x30] sm:$0xff]
    %v241 = vld [vmem:[#allocation5 + $0x38] sm:$0xff]
    %v242 = vld [vmem:[#allocation5 + $0x40] sm:$0xff]
    %v243 = vld [vmem:[#allocation5 + $0x48] sm:$0xff]
    %v244 = vld [vmem:[#allocation5 + $0x50] sm:$0xff]
    %v245 = vld [vmem:[#allocation5 + $0x58] sm:$0xff]
    %v246 = vld [vmem:[#allocation5 + $0x60] sm:$0xff]
    %v247 = vld [vmem:[#allocation5 + $0x68] sm:$0xff]
    %v248 = vld [vmem:[#allocation5 + $0x70] sm:$0xff]
    %v249 = vld [vmem:[#allocation5 + $0x78] sm:$0xff]
    %v250 = vld [vmem:[#allocation5 + $0x80] sm:$0xff]
    %v251 = vld [vmem:[#allocation5 + $0x88] sm:$0xff]
    %v252 = vld [vmem:[#allocation5 + $0x90] sm:$0xff]
    %v253 = vld [vmem:[#allocation5 + $0x98] sm:$0xff]
    %v254 = vld [vmem:[#allocation5 + $0xa0] sm:$0xff]
    %v255 = vld [vmem:[#allocation5 + $0xa8] sm:$0xff]
    %v256 = vld [vmem:[#allocation5 + $0xb0] sm:$0xff]
    %v257 = vld [vmem:[#allocation5 + $0xb8] sm:$0xff]
    %v258 = vld [vmem:[#allocation5 + $0xc0] sm:$0xff]
    %v259 = vld [vmem:[#allocation5 + $0xc8] sm:$0xff]
    %v260 = vld [vmem:[#allocation5 + $0xd0] sm:$0xff]
    %v261 = vld [vmem:[#allocation5 + $0xd8] sm:$0xff]
    %v262 = vld [vmem:[#allocation5 + $0xe0] sm:$0xff]
    %v263 = vld [vmem:[#allocation5 + $0xe8] sm:$0xff]
    %v264 = vld [vmem:[#allocation5 + $0xf0] sm:$0xff]
    %v265 = vld [vmem:[#allocation5 + $0xf8] sm:$0xff]
    %v266 = vld [vmem:[#allocation5 + $0x100] sm:$0xff]
    %v267 = vld [vmem:[#allocation5 + $0x108] sm:$0xff]
    %v268 = vld [vmem:[#allocation5 + $0x110] sm:$0xff]
    %v269 = vld [vmem:[#allocation5 + $0x118] sm:$0xff]
    %v270 = vld [vmem:[#allocation5 + $0x120] sm:$0xff]
    %v271 = vld [vmem:[#allocation5 + $0x128] sm:$0xff]
    %v272 = vld [vmem:[#allocation5 + $0x130] sm:$0xff]
    %v273 = vld [vmem:[#allocation5 + $0x138] sm:$0xff]
    %v274 = vld [vmem:[#allocation5 + $0x140] sm:$0xff]
    %v275 = vld [vmem:[#allocation5 + $0x148] sm:$0xff]
    %v276 = vld [vmem:[#allocation5 + $0x150] sm:$0xff]
    %v277 = vld [vmem:[#allocation5 + $0x158] sm:$0xff]
    %v278 = vld [vmem:[#allocation5 + $0x160] sm:$0xff]
    %v279 = vld [vmem:[#allocation5 + $0x168] sm:$0xff]
    %v280 = vld [vmem:[#allocation5 + $0x170] sm:$0xff]
    %v281 = vld [vmem:[#allocation5 + $0x178] sm:$0xff]
    %v282 = vld [vmem:[#allocation5 + $0x180] sm:$0xff]
    %v283 = vld [vmem:[#allocation5 + $0x188] sm:$0xff]
    %v284 = vld [vmem:[#allocation5 + $0x190] sm:$0xff]
    %v285 = vld [vmem:[#allocation5 + $0x198] sm:$0xff]
    %v286 = vld [vmem:[#allocation5 + $0x1a0] sm:$0xff]
    %v287 = vld [vmem:[#allocation5 + $0x1a8] sm:$0xff]
    %v288 = vld [vmem:[#allocation5 + $0x1b0] sm:$0xff]
    %v289 = vld [vmem:[#allocation5 + $0x1b8] sm:$0xff]
    %v290 = vld [vmem:[#allocation5 + $0x1c0] sm:$0xff]
    %v291 = vld [vmem:[#allocation5 + $0x1c8] sm:$0xff]
    %v292 = vld [vmem:[#allocation5 + $0x1d0] sm:$0xff]
    %v293 = vld [vmem:[#allocation5 + $0x1d8] sm:$0xff]
    %v294 = vld [vmem:[#allocation5 + $0x1e0] sm:$0xff]
    %v295 = vld [vmem:[#allocation5 + $0x1e8] sm:$0xff]
    %v296 = vld [vmem:[#allocation5 + $0x1f0] sm:$0xff]
    %v297 = vld [vmem:[#allocation5 + $0x1f8] sm:$0xff]
    %298 = vmatpush.msra.mxu0 %v264
    %299 = vmatpush.msra.mxu0 %v262
    %300 = vmatpush.msra.mxu0 %v260
    %301 = vmatpush.msra.mxu0 %v258
    %302 = vmatpush.msra.mxu0 %v256
    %303 = vmatpush.msra.mxu0 %v254
    %304 = vmatpush.msra.mxu0 %v252
    %305 = vmatpush.msra.mxu0 %v250
    %306 = vmatpush.msra.mxu0 %v248
    %307 = vmatpush.msra.mxu0 %v246
    %308 = vmatpush.msra.mxu0 %v244
    %309 = vmatpush.msra.mxu0 %v242
    %310 = vmatpush.msra.mxu0 %v240
    %311 = vmatpush.msra.mxu0 %v238
    %312 = vmatpush.msra.mxu0 %v236
    %313 = vmatpush.msra.mxu0 %v234
    %314 = vmatmul.f32.gmra.mxu0 %v226
    %v315 = vpop.f32.mrf.mxu0
    %v316 = vadd.f32 0.0, %v315
    %317 = vmatmul.f32.gmra.mxu0 %v228
    %v318 = vpop.f32.mrf.mxu0
    %v319 = vadd.f32 0.0, %v318
    %320 = vdwg.mxu0
    %321 = vmatpush.msra.mxu0 %v296
    %322 = vmatpush.msra.mxu0 %v294
    %323 = vmatpush.msra.mxu0 %v292
    %324 = vmatpush.msra.mxu0 %v290
    %325 = vmatpush.msra.mxu0 %v288
    %326 = vmatpush.msra.mxu0 %v286
    %327 = vmatpush.msra.mxu0 %v284
    %328 = vmatpush.msra.mxu0 %v282
    %329 = vmatpush.msra.mxu0 %v280
    %330 = vmatpush.msra.mxu0 %v278
    %331 = vmatpush.msra.mxu0 %v276
    %332 = vmatpush.msra.mxu0 %v274
    %333 = vmatpush.msra.mxu0 %v272
    %334 = vmatpush.msra.mxu0 %v270
    %335 = vmatpush.msra.mxu0 %v268
    %336 = vmatpush.msra.mxu0 %v266
    %337 = vmatmul.f32.gmra.mxu0 %v227
    %v338 = vpop.f32.mrf.mxu0
    %v339 = vadd.f32 %v316, %v338
    %340 = vmatmul.f32.gmra.mxu0 %v229
    %v341 = vpop.f32.mrf.mxu0
    %v342 = vadd.f32 %v319, %v341
    %343 = vdwg.mxu0
    %344 = vmatpush.msra.mxu0 %v265
    %345 = vmatpush.msra.mxu0 %v263
    %346 = vmatpush.msra.mxu0 %v261
    %347 = vmatpush.msra.mxu0 %v259
    %348 = vmatpush.msra.mxu0 %v257
    %349 = vmatpush.msra.mxu0 %v255
    %350 = vmatpush.msra.mxu0 %v253
    %351 = vmatpush.msra.mxu0 %v251
    %352 = vmatpush.msra.mxu0 %v249
    %353 = vmatpush.msra.mxu0 %v247
    %354 = vmatpush.msra.mxu0 %v245
    %355 = vmatpush.msra.mxu0 %v243
    %356 = vmatpush.msra.mxu0 %v241
    %357 = vmatpush.msra.mxu0 %v239
    %358 = vmatpush.msra.mxu0 %v237
    %359 = vmatpush.msra.mxu0 %v235
    %360 = vmatmul.f32.gmra.mxu0 %v226
    %v361 = vpop.f32.mrf.mxu0
    %v362 = vadd.f32 0.0, %v361
    %363 = vmatmul.f32.gmra.mxu0 %v228
    %v364 = vpop.f32.mrf.mxu0
    %v365 = vadd.f32 0.0, %v364
    %366 = vdwg.mxu0
    %367 = vmatpush.msra.mxu0 %v297
    %368 = vmatpush.msra.mxu0 %v295
    %369 = vmatpush.msra.mxu0 %v293
    %370 = vmatpush.msra.mxu0 %v291
    %371 = vmatpush.msra.mxu0 %v289
    %372 = vmatpush.msra.mxu0 %v287
    %373 = vmatpush.msra.mxu0 %v285
    %374 = vmatpush.msra.mxu0 %v283
    %375 = vmatpush.msra.mxu0 %v281
    %376 = vmatpush.msra.mxu0 %v279
    %377 = vmatpush.msra.mxu0 %v277
    %378 = vmatpush.msra.mxu0 %v275
    %379 = vmatpush.msra.mxu0 %v273
    %380 = vmatpush.msra.mxu0 %v271
    %381 = vmatpush.msra.mxu0 %v269
    %382 = vmatpush.msra.mxu0 %v267
    %383 = vmatmul.f32.gmra.mxu0 %v227
    %v384 = vpop.f32.mrf.mxu0
    %v385 = vadd.f32 %v362, %v384
    %386 = vmatmul.f32.gmra.mxu0 %v229
    %v387 = vpop.f32.mrf.mxu0
    %v388 = vadd.f32 %v365, %v387
    %389 = vdwg.mxu0
    %v390 = vadd.f32 %v230, %v339
    %v391 = vadd.f32 %v231, %v385
    %v392 = vadd.f32 %v232, %v342
    %v393 = vadd.f32 %v233, %v388
    %394 = vst [vmem:[#allocation2] sm:$0xff] %v390
    %395 = vst [vmem:[#allocation2 + $0x8] sm:$0xff] %v391
    %396 = vst [vmem:[#allocation2 + $0x10] sm:$0xff] %v392
    %397 = vst [vmem:[#allocation2 + $0x18] sm:$0xff] %v393
    // Predicated region
    $region34: #{_feed_forward_impl.1} parent=1 // pred_check
      %p398 = pneg %p52
    $region35: #{_feed_forward_impl.1} parent=1 // pred_check_branch
      %400 = sbr.rel (%p398) target = $region37
    $region36: #{_feed_forward_impl.1} parent=1 // pred_region
      %v401 = vld [vmem:[#allocation2] sm:$0xff]
      %v402 = vld [vmem:[#allocation2 + $0x8] sm:$0xff]
      %v403 = vld [vmem:[#allocation2 + $0x10] sm:$0xff]
      %v404 = vld [vmem:[#allocation2 + $0x18] sm:$0xff]
      %v405 = vld [vmem:[%s4] sm:$0x3]
      %v407 = vperm.slane %v405, 0
      %v408 = vperm.slane %v405, 1
      %v411 = vadd.f32 %v401, %v407
      %v412 = vadd.f32 %v402, %v408
      %v413 = vadd.f32 %v403, %v407
      %v414 = vadd.f32 %v404, %v408
      %415 = vst [vmem:[%s5] sm:$0xff] %v411
      %416 = vst [vmem:[%s5 + $0x8] sm:$0xff] %v412
      %417 = vst [vmem:[%s5 + $0x10] sm:$0xff] %v413
      %418 = vst [vmem:[%s5 + $0x18] sm:$0xff] %v414
    $region37: #{_feed_forward_impl.1} parent=1 // pred_fallthru
      _
    // Predicated region
    $region38: #{_feed_forward_impl.1} parent=1 // pred_check
      _
    $region39: #{_feed_forward_impl.1} parent=1 // pred_check_branch
      %420 = sbr.rel (0) target = $region41
    $region40: #{_feed_forward_impl.1} parent=1 // pred_region
      _
    $region41: #{_feed_forward_impl.1} parent=1 // pred_fallthru
      _
    // Predicated region
    $region42: #{_feed_forward_impl.1} parent=1 // pred_check
      _
    $region43: #{_feed_forward_impl.1} parent=1 // pred_check_branch
      %422 = sbr.rel (0) target = $region45
    $region44: #{_feed_forward_impl.1} parent=1 // pred_region
      _
    $region45: #{_feed_forward_impl.1} parent=1 // pred_fallthru
      _
    %423 = vsyncpa [#allocation4], 1
    %424 = vsyncpa [#allocation6], 1

</llo_original>
